<compile_context>
chip_gen: v6e
topology: v6e:2x2x1
jax: 0.10.0
libtpu: 0.0.40
codegen_flags: <defaults>
</compile_context>

<pallas_src>
import jax
import jax.numpy as jnp
from jax.experimental import pallas as pl
from jax.experimental.pallas import tpu as pltpu

_LANE = 128
_TARGET_BLOCK_BYTES = 2 * 1024 * 1024  # ~2 MiB per block (review recommendation)


def _mish_kernel(x_ref, o_ref):
    # Widen once; all math in f32 (avoids per-op bf16 conversions on v5e).
    x = x_ref[...].astype(jnp.float32)
    # tanh(softplus(x)) = (t^2 + 2t) / (t^2 + 2t + 2),  t = exp(x).
    # Clamp the exp argument; for x > 20 the ratio is 1.0 to f32 precision,
    # so mish(x) == x there (overflow guard).
    t = jnp.exp(jnp.minimum(x, 20.0))        # single EUP transcendental
    numer = t * (t + 2.0)
    denom = numer + 2.0                      # >= 2.0 always -> safe exact divide
    ts = numer / denom                       # exact f32 divide (kernel is HBM-bound)
    y = jnp.where(x > 20.0, x, x * ts)
    o_ref[...] = y.astype(o_ref.dtype)


def _pick_row_tile(rows: int, row_bytes: int) -> int:
    """Balanced row tile: multiple of 8 (or the full extent), ~2 MiB blocks,
    and >= 2 grid steps once the array is big enough for v7x megacore."""
    if rows <= 8:
        return rows
    max_tr = max(8, (_TARGET_BLOCK_BYTES // max(row_bytes, 1)) // 8 * 8)
    nblocks = -(-rows // max_tr)
    # v7x has 2 TensorCores: ensure >= 2 grid steps past ~0.5 MiB so
    # dimension_semantics=("parallel",) has something to shard (and we keep
    # double-buffered pipelining) instead of a single full-extent block.
    if nblocks == 1 and rows * row_bytes > 512 * 1024:
        nblocks = 2
    if nblocks <= 1:
        return rows  # single full-extent block (always a legal block shape)
    tr = -(-rows // nblocks)   # balanced rows per block
    tr = -(-tr // 8) * 8       # sublane-aligned
    return rows if tr >= rows else tr


def _mish_2d(x2d: jax.Array) -> jax.Array:
    """Run the kernel on a lane-dense (rows, lanes) slab."""
    rows, lanes = x2d.shape
    itemsize = jnp.dtype(x2d.dtype).itemsize
    tr = _pick_row_tile(rows, lanes * itemsize)
    grid = (pl.cdiv(rows, tr),)            # partial last block is masked by Pallas

    n = rows * lanes
    cost = pl.CostEstimate(
        flops=8 * n,
        transcendentals=n,
        bytes_accessed=2 * n * itemsize,
    )

    return pl.pallas_call(
        _mish_kernel,
        out_shape=jax.ShapeDtypeStruct((rows, lanes), x2d.dtype),
        grid_spec=pltpu.PrefetchScalarGridSpec(
            num_scalar_prefetch=0,
            grid=grid,
            in_specs=[pl.BlockSpec((tr, lanes), lambda i: (i, 0))],
            out_specs=pl.BlockSpec((tr, lanes), lambda i: (i, 0)),
        ),
        compiler_params=pltpu.CompilerParams(
            dimension_semantics=("parallel",),
        ),
        cost_estimate=cost,
    )(x2d)


def _mish_jnp(x: jax.Array) -> jax.Array:
    """Plain-JAX Mish (used only for sub-128-element ragged tails)."""
    xf = x.astype(jnp.float32)
    return (xf * jnp.tanh(jax.nn.softplus(xf))).astype(x.dtype)


def mish(x: jax.Array) -> jax.Array:
    """Mish activation via a Pallas TPU kernel. Any shape / float dtype."""
    orig_shape = x.shape
    n = x.size
    if n == 0:
        return x

    if n % _LANE == 0:
        # Zero-copy lane-dense slab. Prefer 1024-wide rows when possible
        # (fewer/longer DMA rows, lane-denser out_spec).
        lanes = 1024 if n % 1024 == 0 else _LANE
        return _mish_2d(x.reshape(n // lanes, lanes)).reshape(orig_shape)

    # Ragged: kernel on the largest 128-aligned prefix, jnp on the tiny tail.
    # (No pad/ravel or [:n]-slice full-array round-trips.)
    flat = x.reshape(-1)
    m = (n // _LANE) * _LANE
    if m == 0:
        return _mish_jnp(x)
    head = _mish_2d(flat[:m].reshape(m // _LANE, _LANE)).reshape(-1)
    tail = _mish_jnp(flat[m:])
    return jnp.concatenate([head, tail]).reshape(orig_shape)


def _mish_ref(x):
    # Pure-JAX reference (matches torch: x * tanh(softplus(x))), computed in f32.
    xf = x.astype(jnp.float32)
    return (xf * jnp.tanh(jax.nn.softplus(xf))).astype(x.dtype)


if __name__ == "__main__":
    key = jax.random.PRNGKey(0)

    # Main check: NCHW conv-activation shape (numel % 128 == 0 -> zero-copy path).
    x = jax.random.normal(key, (2, 4, 16, 16), dtype=jnp.float32) * 3.0
    y = jax.block_until_ready(mish(x))
    y_ref = _mish_ref(x)
    assert y.shape == x.shape and y.dtype == x.dtype
    assert jnp.allclose(y, y_ref, atol=1e-5, rtol=1e-4), "Mish kernel mismatch (f32)"

    # Ragged shape (exercises the aligned-prefix + jnp-tail path).
    x2 = jax.random.normal(jax.random.PRNGKey(1), (3, 5, 7, 11), dtype=jnp.float32) * 3.0
    y2 = jax.block_until_ready(mish(x2))
    assert jnp.allclose(y2, _mish_ref(x2), atol=1e-5, rtol=1e-4), "Mish kernel mismatch (ragged)"

    # bf16 path (f32 internal compute, single narrow at store).
    xb = (jax.random.normal(jax.random.PRNGKey(2), (2, 4, 16, 16)) * 3.0).astype(jnp.bfloat16)
    yb = jax.block_until_ready(mish(xb))
    assert yb.dtype == jnp.bfloat16
    assert jnp.allclose(yb.astype(jnp.float32), _mish_ref(xb).astype(jnp.float32),
                        atol=3e-2, rtol=3e-2), "Mish kernel mismatch (bf16)"

    print("KERNEL_OK")
</pallas_src>

<mosaic_0001>
module attributes {stable_mosaic.version = 11 : i64} {
  func.func @_mish_kernel(%arg0: i32, %arg1: memref<2x1024xf32, #tpu.memory_space<vmem>>, %arg2: memref<2x1024xf32, #tpu.memory_space<vmem>>) attributes {dimension_semantics = [#tpu.dimension_semantics<parallel>], iteration_bounds = array<i64: 1>, scalar_prefetch = 0 : i64, scratch_operands = 0 : i64, tpu.core_type = #tpu.core_type<tc>, window_params = [{transform_indices = @transform_0, window_bounds = array<i64: 2, 1024>}, {transform_indices = @transform_1, window_bounds = array<i64: 2, 1024>}]} {
    %c0 = arith.constant 0 : index
    %c0_0 = arith.constant 0 : index
    %0 = vector.load %arg1[%c0, %c0_0] : memref<2x1024xf32, #tpu.memory_space<vmem>>, vector<2x1024xf32>
    %cst = arith.constant 2.000000e+01 : f32
    %1 = vector.broadcast %cst : f32 to vector<2x1024xf32>
    %2 = arith.minimumf %0, %1 : vector<2x1024xf32>
    %3 = math.exp %2 : vector<2x1024xf32>
    %cst_1 = arith.constant 2.000000e+00 : f32
    %4 = vector.broadcast %cst_1 : f32 to vector<2x1024xf32>
    %5 = arith.addf %3, %4 : vector<2x1024xf32>
    %6 = arith.mulf %3, %5 : vector<2x1024xf32>
    %cst_2 = arith.constant 2.000000e+00 : f32
    %7 = vector.broadcast %cst_2 : f32 to vector<2x1024xf32>
    %8 = arith.addf %6, %7 : vector<2x1024xf32>
    %9 = arith.divf %6, %8 : vector<2x1024xf32>
    %cst_3 = arith.constant 2.000000e+01 : f32
    %10 = vector.broadcast %cst_3 : f32 to vector<2x1024xf32>
    %11 = arith.cmpf ogt, %0, %10 : vector<2x1024xf32>
    %12 = arith.mulf %0, %9 : vector<2x1024xf32>
    %13 = arith.select %11, %0, %12 : vector<2x1024xi1>, vector<2x1024xf32>
    %c0_4 = arith.constant 0 : index
    %c0_5 = arith.constant 0 : index
    %14 = vector.load %arg2[%c0_4, %c0_5] : memref<2x1024xf32, #tpu.memory_space<vmem>>, vector<2x1024xf32>
    tpu.vector_store %arg2[%c0_4, %c0_5], %13 {strides = array<i32>} : memref<2x1024xf32, #tpu.memory_space<vmem>>, vector<2x1024xf32>,
    return
  }
  func.func @transform_0(%arg0: i32) -> (i32, i32) {
    %c0_i32 = arith.constant 0 : i32
    %c0_i32_0 = arith.constant 0 : i32
    return %arg0, %c0_i32 : i32, i32
  }
  func.func @transform_1(%arg0: i32) -> (i32, i32) {
    %c0_i32 = arith.constant 0 : i32
    %c0_i32_0 = arith.constant 0 : i32
    return %arg0, %c0_i32 : i32, i32
  }
}

</mosaic_0001>

<llo_original>
// kernel: tpu_custom_call.1
$region0: #{tpu_custom_call.1}
  #allocation0 [shape = 'u32[]', space=smem, size = 0x4, offset = 0x4, fixed_abs, tag = 'smem constant byte address 0x4 - core index']
  #allocation1 [shape = 'u32[144,128]{1,0:T(1,128)}', space=vmem, size = 0x12000, scoped, tag = 'internal scratch']
  %s0 = inlined_call_operand.hbm [shape: f32[2,1024], index: 0, kind: input, shape index: {}]
  %s1 = inlined_call_operand.hbm [shape: f32[2,1024], index: 1, kind: output, shape index: {}]
  %s2 = sld [smem:[#allocation0]]
  $region18: #{tpu_custom_call.1} parent=0
    _
  %s4 = ssub.s32 1, %s2
  %s5 = scalar_select 0, %s4, %s2
  $region1: #{tpu_custom_call.1} parent=0
    #allocation2 [shape = 'u8[8192]{0}', space=vmem, size = 0x2000, scoped, tag = 'input window, operand 0, single buffered']
    #allocation3 [shape = 's32[1]{0}', space=sflag, size = 0x4, scoped, tag = 'scoped memory for tpu_custom_call.1']
    #allocation4 [shape = 's32[1]{0}', space=sflag, size = 0x4, scoped, tag = 'scoped memory for tpu_custom_call.1']
    #allocation5 [shape = 'u8[8192]{0}', space=vmem, size = 0x2000, scoped, tag = 'output window, operand 0, single buffered']
    %6 = vsyncpa [#allocation3], 0
    %7 = vsyncpa [#allocation4], 0
    // Predicated region
    $region2: #{tpu_custom_call.1} parent=1 // pred_check
      _
    $region3: #{tpu_custom_call.1} parent=1 // pred_check_branch
      %9 = sbr.rel (0) target = $region5
    $region4: #{tpu_custom_call.1} parent=1 // pred_region
      %s11 = ssub.s32 256, 256
      %12 = vsyncadd [#allocation3], %s11
      %s14 = sshll.u32 [#allocation2], 4
      %s15 = int_to_ptr.vmem [resolvable:$true] %s14
      %17 = dma.hbm_to_vmem [thread:$0]  %s0, 256, %s15, [#allocation3]
    $region5: #{tpu_custom_call.1} parent=1 // pred_fallthru
      _
    // Predicated region
    $region6: #{tpu_custom_call.1} parent=1 // pred_check
      _
    $region7: #{tpu_custom_call.1} parent=1 // pred_check_branch
      %19 = sbr.rel (0) target = $region9
    $region8: #{tpu_custom_call.1} parent=1 // pred_region
      %20 = dma.done [#allocation3], 256
    $region9: #{tpu_custom_call.1} parent=1 // pred_fallthru
      _
    %v21 = vld [vmem:[#allocation2] sm:$0xff]
    %v22 = vld [vmem:[#allocation2 + $0x8] sm:$0xff]
    %v23 = vmin.f32 %v21, 20.0
    %v24 = vmin.f32 %v22, 20.0
    %v25 = vmul.f32 %v23, 1.442695
    %v26 = vpow.pop %v25
    %v27 = vmul.f32 %v24, 1.442695
    %v28 = vpow.pop %v27
    %v29 = vadd.f32 %v26, 2.0
    %v30 = vadd.f32 %v28, 2.0
    %v31 = vmul.f32 %v26, %v29
    %v32 = vmul.f32 %v28, %v30
    %v33 = vadd.f32 %v31, 2.0
    %v34 = vadd.f32 %v32, 2.0
    %v35 = vrcp.pop %v33
    %v36 = vmul.f32 %v31, %v35
    %v37 = vrcp.pop %v34
    %v38 = vmul.f32 %v32, %v37
    %vm39 = vcmp.gt.f32.partialorder %v21, 20.0
    %vm40 = vcmp.gt.f32.partialorder %v22, 20.0
    %v41 = vmul.f32 %v21, %v36
    %v42 = vmul.f32 %v22, %v38
    %v43 = vsel %vm39, %v21, %v41
    %v44 = vsel %vm40, %v22, %v42
    %45 = vst [vmem:[#allocation5] sm:$0xff] %v43
    %46 = vst [vmem:[#allocation5 + $0x8] sm:$0xff] %v44
    // Predicated region
    $region10: #{tpu_custom_call.1} parent=1 // pred_check
      _
    $region11: #{tpu_custom_call.1} parent=1 // pred_check_branch
      %48 = sbr.rel (0) target = $region13
    $region12: #{tpu_custom_call.1} parent=1 // pred_region
      %s50 = ssub.s32 256, 256
      %51 = vsyncadd [#allocation4], %s50
      %s53 = sshll.u32 [#allocation5], 4
      %s54 = int_to_ptr.vmem [resolvable:$true] %s53
      %56 = dma.vmem_to_hbm [thread:$0]  %s54, 256, %s1, [#allocation4]
    $region13: #{tpu_custom_call.1} parent=1 // pred_fallthru
      _
    // Predicated region
    $region14: #{tpu_custom_call.1} parent=1 // pred_check
      _
    $region15: #{tpu_custom_call.1} parent=1 // pred_check_branch
      %58 = sbr.rel (0) target = $region17
    $region16: #{tpu_custom_call.1} parent=1 // pred_region
      %59 = dma.done [#allocation4], 256
    $region17: #{tpu_custom_call.1} parent=1 // pred_fallthru
      _
    %60 = vsyncpa [#allocation3], 1
    %61 = vsyncpa [#allocation4], 1

</llo_original>
